<compile_context>
chip_gen: v6e
topology: v6e:2x2x1
jax: 0.10.0
libtpu: 0.0.40
codegen_flags: <defaults>
</compile_context>

<pallas_src>
import functools
import math

import jax
import jax.numpy as jnp
from jax.experimental import pallas as pl
from jax.experimental.pallas import tpu as pltpu


def _round_up(x, m):
    return (x + m - 1) // m * m


# --------------------------------------------------------------------------------------
# Kernel
# --------------------------------------------------------------------------------------
def _mlp_kernel(n_layers, x_ref, w_ref, b_ref, out_ref):
    """Fused MLP body.

    x_ref:   (TILE_B, D)        bf16 activations (zero-padded feature lanes).
    w_ref:   (n_layers, D, D)   bf16 stacked, zero-padded weights (VMEM-resident).
    b_ref:   (n_layers, 1, D)   f32 stacked, zero-padded biases.
    out_ref: (TILE_B, D)        bf16 output tile (only first action_size lanes are real).
    """
    x = x_ref[...]  # bf16
    for i in range(n_layers):
        # bf16 matmul inputs, f32 MXU accumulation; bias-add / ReLU kept in f32 (v5e VPU).
        y = jnp.dot(x, w_ref[i], preferred_element_type=jnp.float32) + b_ref[i]
        if i < n_layers - 1:
            x = jnp.maximum(y, 0.0).astype(x_ref.dtype)  # single down-cast per layer
        else:
            out_ref[...] = y.astype(out_ref.dtype)


# --------------------------------------------------------------------------------------
# One-time param preparation (hoisted out of the hot path)
# --------------------------------------------------------------------------------------
def prepare_q_net_params(params, *, lane=128, weight_dtype=jnp.bfloat16):
    """Pad, cast and stack Q_Net params once.

    params: list of (W_t, b) with W_t shape (in, out), b shape (1, out), f32.
    Returns (w_stack, b_stack, meta):
      w_stack: (n_layers, D, D)  weight_dtype, zero-padded
      b_stack: (n_layers, 1, D)  f32, zero-padded
    """
    n_layers = len(params)
    dims = [params[0][0].shape[0]] + [w.shape[1] for w, _ in params]
    d_pad = max(_round_up(d, lane) for d in dims)  # 37/64/4 -> 128; never pad beyond 128

    w_stack = jnp.zeros((n_layers, d_pad, d_pad), weight_dtype)
    b_stack = jnp.zeros((n_layers, 1, d_pad), jnp.float32)
    for i, (w, b) in enumerate(params):
        w_stack = w_stack.at[i, : w.shape[0], : w.shape[1]].set(w.astype(weight_dtype))
        b_stack = b_stack.at[i, :, : b.shape[1]].set(b.astype(jnp.float32))

    meta = dict(state_size=dims[0], action_size=dims[-1], d_pad=d_pad, n_layers=n_layers)
    return w_stack, b_stack, meta


# --------------------------------------------------------------------------------------
# Forward wrapper
# --------------------------------------------------------------------------------------
def q_net_forward(state, w_stack, b_stack, meta, *, tile_batch=None,
                  out_dtype=jnp.bfloat16):
    """Forward pass of Q_Net using pre-prepared (padded/cast/stacked) params.

    state: (batch, state_size) array.
    Returns (batch, action_size) Q-values in `out_dtype`.
    """
    n_layers = meta["n_layers"]
    d_pad = meta["d_pad"]
    state_size = meta["state_size"]
    action_size = meta["action_size"]
    batch = state.shape[0]

    # Adaptive batch tile: tiny batches get one minimal tile (no padding waste); large
    # batches get >=2 grid steps (v7x megacore split) capped at 512 rows per step.
    if tile_batch is None:
        if batch <= 256:
            tile_batch = max(16, _round_up(batch, 16))
        else:
            tile_batch = min(512, _round_up((batch + 1) // 2, 16))
    batch_p = _round_up(batch, tile_batch)

    # Input cast to bf16 once here (kernel consumes bf16 anyway) and zero-padded:
    # padded feature columns hit zero weight rows, padded batch rows are sliced off below.
    state_p = (jnp.zeros((batch_p, d_pad), jnp.bfloat16)
               .at[:batch, :state_size].set(state.astype(jnp.bfloat16)))

    grid = (batch_p // tile_batch,)
    kernel = functools.partial(_mlp_kernel, n_layers)

    out_padded = pl.pallas_call(
        kernel,
        out_shape=jax.ShapeDtypeStruct((batch_p, d_pad), out_dtype),
        grid=grid,
        in_specs=[
            # Activations: batch-tiled, double-buffered by the default pipeline.
            pl.BlockSpec((tile_batch, d_pad), lambda i: (i, 0)),
            # Params: constant block, single-buffered, stay VMEM-resident across grid steps.
            pl.BlockSpec((n_layers, d_pad, d_pad), lambda i: (0, 0, 0),
                         pipeline_mode=pl.Buffered(1)),
            pl.BlockSpec((n_layers, 1, d_pad), lambda i: (0, 0, 0),
                         pipeline_mode=pl.Buffered(1)),
        ],
        out_specs=pl.BlockSpec((tile_batch, d_pad), lambda i: (i, 0)),
        compiler_params=pltpu.CompilerParams(dimension_semantics=("parallel",)),
    )(state_p, w_stack, b_stack)

    return out_padded[:batch, :action_size]


# --------------------------------------------------------------------------------------
# Init + pure-JAX reference
# --------------------------------------------------------------------------------------
def init_q_net_params(key, state_size, hidden_layers, action_size):
    """Deterministic init mimicking torch.nn.Linear default U[-1/sqrt(fan_in), 1/sqrt(fan_in)]."""
    dims = [state_size] + list(hidden_layers) + [action_size]
    params = []
    for fan_in, fan_out in zip(dims[:-1], dims[1:]):
        key, kw, kb = jax.random.split(key, 3)
        bound = 1.0 / math.sqrt(fan_in)
        # Weight stored already transposed to (in, out) for the kernel (x @ W + b).
        w_t = jax.random.uniform(kw, (fan_in, fan_out), jnp.float32, -bound, bound)
        b = jax.random.uniform(kb, (1, fan_out), jnp.float32, -bound, bound)
        params.append((w_t, b))
    return params


def q_net_reference(state, params):
    """Pure-JAX f32 reference for correctness checking."""
    x = state
    for i, (w_t, b) in enumerate(params):
        x = x @ w_t + b
        if i < len(params) - 1:
            x = jnp.maximum(x, 0.0)
    return x


if __name__ == "__main__":
    # Banana-env-like config, kept small: state_size=37, hidden_layers=[64, 64], action_size=4.
    state_size = 37
    hidden_layers = [64, 64]      # hidden_layer_size == 2
    action_size = 4

    key = jax.random.PRNGKey(0)
    key, k_small, k_big = jax.random.split(key, 3)

    params = init_q_net_params(key, state_size, hidden_layers, action_size)
    # One-time padding / bf16 cast / stacking (hoisted out of the forward hot path).
    w_stack, b_stack, meta = prepare_q_net_params(params)

    # --- small batch: single minimal tile (16 rows), grid=(1,) -----------------------
    state_small = jax.random.normal(k_small, (8, state_size), jnp.float32)
    q_small = jax.block_until_ready(q_net_forward(state_small, w_stack, b_stack, meta))
    ref_small = q_net_reference(state_small, params)
    assert q_small.shape == (8, action_size)
    assert jnp.allclose(q_small.astype(jnp.float32), ref_small, atol=5e-2, rtol=5e-2), \
        "small-batch mismatch vs reference"

    # --- larger batch: multi-step grid (exercises batch tiling / v7x megacore path) ---
    state_big = jax.random.normal(k_big, (300, state_size), jnp.float32)
    q_big = jax.block_until_ready(q_net_forward(state_big, w_stack, b_stack, meta))
    ref_big = q_net_reference(state_big, params)
    assert q_big.shape == (300, action_size)
    assert jnp.allclose(q_big.astype(jnp.float32), ref_big, atol=5e-2, rtol=5e-2), \
        "large-batch mismatch vs reference"

    print("KERNEL_OK")
</pallas_src>

<mosaic_0001>
module attributes {stable_mosaic.version = 11 : i64} {
  func.func @_mlp_kernel(%arg0: i32, %arg1: memref<16x128xbf16, #tpu.memory_space<vmem>>, %arg2: memref<3x128x128xbf16, #tpu.memory_space<vmem>>, %arg3: memref<3x1x128xf32, #tpu.memory_space<vmem>>, %arg4: memref<16x128xbf16, #tpu.memory_space<vmem>>) attributes {dimension_semantics = [#tpu.dimension_semantics<parallel>], iteration_bounds = array<i64: 1>, scalar_prefetch = 0 : i64, scratch_operands = 0 : i64, tpu.core_type = #tpu.core_type<tc>, window_params = [{transform_indices = @transform_0, window_bounds = array<i64: 16, 128>}, {pipeline_mode = #tpu.pipeline_mode<synchronous>, transform_indices = @transform_1, window_bounds = array<i64: 3, 128, 128>}, {pipeline_mode = #tpu.pipeline_mode<synchronous>, transform_indices = @transform_2, window_bounds = array<i64: 3, 1, 128>}, {transform_indices = @transform_3, window_bounds = array<i64: 16, 128>}]} {
    %c0 = arith.constant 0 : index
    %c0_0 = arith.constant 0 : index
    %0 = vector.load %arg1[%c0, %c0_0] : memref<16x128xbf16, #tpu.memory_space<vmem>>, vector<16x128xbf16>
    %c0_1 = arith.constant 0 : index
    %c0_2 = arith.constant 0 : index
    %c0_3 = arith.constant 0 : index
    %1 = vector.load %arg2[%c0_1, %c0_2, %c0_3] : memref<3x128x128xbf16, #tpu.memory_space<vmem>>, vector<1x128x128xbf16>
    %2 = vector.shape_cast %1 : vector<1x128x128xbf16> to vector<128x128xbf16>
    %cst = arith.constant dense<0.000000e+00> : vector<16x128xf32>
    %3 = tpu.matmul %0, %2, %cst {dimension_numbers = #tpu.dot_dimension_numbers<[1], [0], [0], [1], [0, 0, 1, 1], [], []>} : vector<16x128xbf16>, vector<128x128xbf16>, vector<16x128xf32> -> vector<16x128xf32>
    %c0_4 = arith.constant 0 : index
    %c0_5 = arith.constant 0 : index
    %c0_6 = arith.constant 0 : index
    %4 = vector.load %arg3[%c0_4, %c0_5, %c0_6] : memref<3x1x128xf32, #tpu.memory_space<vmem>>, vector<1x1x128xf32>
    %5 = vector.shape_cast %4 : vector<1x1x128xf32> to vector<1x128xf32>
    %6 = vector.broadcast %5 : vector<1x128xf32> to vector<16x128xf32>
    %7 = arith.addf %3, %6 : vector<16x128xf32>
    %cst_7 = arith.constant 0.000000e+00 : f32
    %8 = vector.broadcast %cst_7 : f32 to vector<16x128xf32>
    %9 = arith.maximumf %7, %8 : vector<16x128xf32>
    %10 = arith.truncf %9 : vector<16x128xf32> to vector<16x128xbf16>
    %c1 = arith.constant 1 : index
    %c0_8 = arith.constant 0 : index
    %c0_9 = arith.constant 0 : index
    %11 = vector.load %arg2[%c1, %c0_8, %c0_9] : memref<3x128x128xbf16, #tpu.memory_space<vmem>>, vector<1x128x128xbf16>
    %12 = vector.shape_cast %11 : vector<1x128x128xbf16> to vector<128x128xbf16>
    %cst_10 = arith.constant dense<0.000000e+00> : vector<16x128xf32>
    %13 = tpu.matmul %10, %12, %cst_10 {dimension_numbers = #tpu.dot_dimension_numbers<[1], [0], [0], [1], [0, 0, 1, 1], [], []>} : vector<16x128xbf16>, vector<128x128xbf16>, vector<16x128xf32> -> vector<16x128xf32>
    %c1_11 = arith.constant 1 : index
    %c0_12 = arith.constant 0 : index
    %c0_13 = arith.constant 0 : index
    %14 = vector.load %arg3[%c1_11, %c0_12, %c0_13] : memref<3x1x128xf32, #tpu.memory_space<vmem>>, vector<1x1x128xf32>
    %15 = vector.shape_cast %14 : vector<1x1x128xf32> to vector<1x128xf32>
    %16 = vector.broadcast %15 : vector<1x128xf32> to vector<16x128xf32>
    %17 = arith.addf %13, %16 : vector<16x128xf32>
    %cst_14 = arith.constant 0.000000e+00 : f32
    %18 = vector.broadcast %cst_14 : f32 to vector<16x128xf32>
    %19 = arith.maximumf %17, %18 : vector<16x128xf32>
    %20 = arith.truncf %19 : vector<16x128xf32> to vector<16x128xbf16>
    %c2 = arith.constant 2 : index
    %c0_15 = arith.constant 0 : index
    %c0_16 = arith.constant 0 : index
    %21 = vector.load %arg2[%c2, %c0_15, %c0_16] : memref<3x128x128xbf16, #tpu.memory_space<vmem>>, vector<1x128x128xbf16>
    %22 = vector.shape_cast %21 : vector<1x128x128xbf16> to vector<128x128xbf16>
    %cst_17 = arith.constant dense<0.000000e+00> : vector<16x128xf32>
    %23 = tpu.matmul %20, %22, %cst_17 {dimension_numbers = #tpu.dot_dimension_numbers<[1], [0], [0], [1], [0, 0, 1, 1], [], []>} : vector<16x128xbf16>, vector<128x128xbf16>, vector<16x128xf32> -> vector<16x128xf32>
    %c2_18 = arith.constant 2 : index
    %c0_19 = arith.constant 0 : index
    %c0_20 = arith.constant 0 : index
    %24 = vector.load %arg3[%c2_18, %c0_19, %c0_20] : memref<3x1x128xf32, #tpu.memory_space<vmem>>, vector<1x1x128xf32>
    %25 = vector.shape_cast %24 : vector<1x1x128xf32> to vector<1x128xf32>
    %26 = vector.broadcast %25 : vector<1x128xf32> to vector<16x128xf32>
    %27 = arith.addf %23, %26 : vector<16x128xf32>
    %28 = arith.truncf %27 : vector<16x128xf32> to vector<16x128xbf16>
    %c0_21 = arith.constant 0 : index
    %c0_22 = arith.constant 0 : index
    %29 = vector.load %arg4[%c0_21, %c0_22] : memref<16x128xbf16, #tpu.memory_space<vmem>>, vector<16x128xbf16>
    tpu.vector_store %arg4[%c0_21, %c0_22], %28 {strides = array<i32>} : memref<16x128xbf16, #tpu.memory_space<vmem>>, vector<16x128xbf16>,
    return
  }
  func.func @transform_0(%arg0: i32) -> (i32, i32) {
    %c0_i32 = arith.constant 0 : i32
    %c0_i32_0 = arith.constant 0 : i32
    return %arg0, %c0_i32 : i32, i32
  }
  func.func @transform_1(%arg0: i32) -> (i32, i32, i32) {
    %c0_i32 = arith.constant 0 : i32
    %c0_i32_0 = arith.constant 0 : i32
    %c0_i32_1 = arith.constant 0 : i32
    %c0_i32_2 = arith.constant 0 : i32
    return %c0_i32, %c0_i32_0, %c0_i32_1 : i32, i32, i32
  }
  func.func @transform_2(%arg0: i32) -> (i32, i32, i32) {
    %c0_i32 = arith.constant 0 : i32
    %c0_i32_0 = arith.constant 0 : i32
    %c0_i32_1 = arith.constant 0 : i32
    %c0_i32_2 = arith.constant 0 : i32
    return %c0_i32, %c0_i32_0, %c0_i32_1 : i32, i32, i32
  }
  func.func @transform_3(%arg0: i32) -> (i32, i32) {
    %c0_i32 = arith.constant 0 : i32
    %c0_i32_0 = arith.constant 0 : i32
    return %arg0, %c0_i32 : i32, i32
  }
}

</mosaic_0001>

<llo_original>
// kernel: tpu_custom_call.1
$region0: #{tpu_custom_call.1}
  #allocation0 [shape = 'u32[]', space=smem, size = 0x4, offset = 0x4, fixed_abs, tag = 'smem constant byte address 0x4 - core index']
  #allocation1 [shape = 'u32[144,128]{1,0:T(1,128)}', space=vmem, size = 0x12000, scoped, tag = 'internal scratch']
  %s0 = inlined_call_operand.hbm [shape: bf16[16,128], index: 0, kind: input, shape index: {}]
  %s1 = inlined_call_operand.hbm [shape: bf16[3,128,128], index: 1, kind: input, shape index: {}]
  %s2 = inlined_call_operand.vmem [shape: f32[3,1,128], index: 2, kind: input, shape index: {}]
  %s3 = inlined_call_operand.hbm [shape: bf16[16,128], index: 3, kind: output, shape index: {}]
  %s4 = sld [smem:[#allocation0]]
  $region30: #{tpu_custom_call.1} parent=0
    _
  %s6 = ssub.s32 1, %s4
  %s7 = scalar_select 0, %s6, %s4
  $region1: #{tpu_custom_call.1} parent=0
    #allocation2 [shape = 'u8[4096]{0}', space=vmem, size = 0x1000, scoped, tag = 'input window, operand 0, single buffered']
    #allocation3 [shape = 's32[1]{0}', space=sflag, size = 0x4, scoped, tag = 'scoped memory for tpu_custom_call.1']
    #allocation4 [shape = 's32[1]{0}', space=sflag, size = 0x4, scoped, tag = 'scoped memory for tpu_custom_call.1']
    #allocation5 [shape = 'u8[98304]{0}', space=vmem, size = 0x18000, scoped, tag = 'input window, operand 1, single buffered']
    #allocation6 [shape = 's32[1]{0}', space=sflag, size = 0x4, scoped, tag = 'scoped memory for tpu_custom_call.1']
    #allocation7 [shape = 'u8[4096]{0}', space=vmem, size = 0x1000, scoped, tag = 'output window, operand 0, single buffered']
    %8 = vsyncpa [#allocation3], 0
    %9 = vsyncpa [#allocation6], 0
    %10 = vsyncpa [#allocation4], 0
    // Predicated region
    $region2: #{tpu_custom_call.1} parent=1 // pred_check
      _
    $region3: #{tpu_custom_call.1} parent=1 // pred_check_branch
      %12 = sbr.rel (0) target = $region5
    $region4: #{tpu_custom_call.1} parent=1 // pred_region
      %s14 = ssub.s32 128, 128
      %15 = vsyncadd [#allocation3], %s14
      %s16 = sshll.u32 [#allocation2], 4
      %s17 = int_to_ptr.vmem [resolvable:$true] %s16
      %22 = dma.hbm_to_vmem [thread:$0]  %s0, 128, %s17, [#allocation3], 64, 64, 4
    $region5: #{tpu_custom_call.1} parent=1 // pred_fallthru
      _
    // Predicated region
    $region6: #{tpu_custom_call.1} parent=1 // pred_check
      _
    $region7: #{tpu_custom_call.1} parent=1 // pred_check_branch
      %24 = sbr.rel (0) target = $region9
    $region8: #{tpu_custom_call.1} parent=1 // pred_region
      %s26 = ssub.s32 3072, 3072
      %27 = vsyncadd [#allocation6], %s26
      %s28 = sshll.u32 [#allocation5], 4
      %s29 = int_to_ptr.vmem [resolvable:$true] %s28
      %34 = dma.hbm_to_vmem [thread:$0]  %s1, 3072, %s29, [#allocation6], 64, 64, 4
    $region9: #{tpu_custom_call.1} parent=1 // pred_fallthru
      _
    // Predicated region
    $region10: #{tpu_custom_call.1} parent=1 // pred_check
      _
    $region11: #{tpu_custom_call.1} parent=1 // pred_check_branch
      %36 = sbr.rel (0) target = $region13
    $region12: #{tpu_custom_call.1} parent=1 // pred_region
      _
    $region13: #{tpu_custom_call.1} parent=1 // pred_fallthru
      _
    // Predicated region
    $region14: #{tpu_custom_call.1} parent=1 // pred_check
      _
    $region15: #{tpu_custom_call.1} parent=1 // pred_check_branch
      %38 = sbr.rel (0) target = $region17
    $region16: #{tpu_custom_call.1} parent=1 // pred_region
      %39 = dma.done [#allocation3], 128
    $region17: #{tpu_custom_call.1} parent=1 // pred_fallthru
      _
    // Predicated region
    $region18: #{tpu_custom_call.1} parent=1 // pred_check
      _
    $region19: #{tpu_custom_call.1} parent=1 // pred_check_branch
      %41 = sbr.rel (0) target = $region21
    $region20: #{tpu_custom_call.1} parent=1 // pred_region
      %42 = dma.done [#allocation6], 3072
    $region21: #{tpu_custom_call.1} parent=1 // pred_fallthru
      _
    %v44 = vld [vmem:[#allocation2] sm:$0xf]
    %v45 = vld [vmem:[#allocation2 + $0x4] sm:$0xf]
    %v46 = vld [vmem:[#allocation5] sm:$0xf]
    %v47 = vld [vmem:[#allocation5 + $0x4] sm:$0xf]
    %v48 = vld [vmem:[#allocation5 + $0x8] sm:$0xf]
    %v49 = vld [vmem:[#allocation5 + $0xc] sm:$0xf]
    %v50 = vld [vmem:[#allocation5 + $0x10] sm:$0xf]
    %v51 = vld [vmem:[#allocation5 + $0x14] sm:$0xf]
    %v52 = vld [vmem:[#allocation5 + $0x18] sm:$0xf]
    %v53 = vld [vmem:[#allocation5 + $0x1c] sm:$0xf]
    %v54 = vld [vmem:[#allocation5 + $0x20] sm:$0xf]
    %v55 = vld [vmem:[#allocation5 + $0x24] sm:$0xf]
    %v56 = vld [vmem:[#allocation5 + $0x28] sm:$0xf]
    %v57 = vld [vmem:[#allocation5 + $0x2c] sm:$0xf]
    %v58 = vld [vmem:[#allocation5 + $0x30] sm:$0xf]
    %v59 = vld [vmem:[#allocation5 + $0x34] sm:$0xf]
    %v60 = vld [vmem:[#allocation5 + $0x38] sm:$0xf]
    %v61 = vld [vmem:[#allocation5 + $0x3c] sm:$0xf]
    %v62 = vld [vmem:[%s2] sm:$0x1]
    %v64 = vlaneseq
    %v65 = vshrl.u32 %v64, 7
    %v66 = vsub.s32 0, %v65
    %v67 = vrot.slane %v62, %v66
    %v71 = vunpack.c.l.b16 %v44
    %v72 = vunpack.c.l.b16 %v45
    %v73 = vpack.c.b16 %v72, %v71
    %v91 = vunpack.c.l.b16 %v46
    %v92 = vunpack.c.l.b16 %v47
    %v93 = vunpack.c.l.b16 %v48
    %v94 = vunpack.c.l.b16 %v49
    %v95 = vunpack.c.l.b16 %v50
    %v96 = vunpack.c.l.b16 %v51
    %v97 = vunpack.c.l.b16 %v52
    %v98 = vunpack.c.l.b16 %v53
    %v99 = vunpack.c.l.b16 %v54
    %v100 = vunpack.c.l.b16 %v55
    %v101 = vunpack.c.l.b16 %v56
    %v102 = vunpack.c.l.b16 %v57
    %v103 = vunpack.c.l.b16 %v58
    %v104 = vunpack.c.l.b16 %v59
    %v105 = vunpack.c.l.b16 %v60
    %v106 = vunpack.c.l.b16 %v61
    %v107 = vpack.c.b16 %v92, %v91
    %v108 = vpack.c.b16 %v94, %v93
    %v109 = vpack.c.b16 %v96, %v95
    %v110 = vpack.c.b16 %v98, %v97
    %v111 = vpack.c.b16 %v100, %v99
    %v112 = vpack.c.b16 %v102, %v101
    %v113 = vpack.c.b16 %v104, %v103
    %v114 = vpack.c.b16 %v106, %v105
    %123 = vmatprep.subr.bf16.mxu0 0
    %124 = vmatpush1.bf16.msra.mxu0 %v114
    %125 = vmatprep.subr.bf16.mxu0 0
    %126 = vmatpush1.bf16.msra.mxu0 %v113
    %127 = vmatprep.subr.bf16.mxu0 0
    %128 = vmatpush1.bf16.msra.mxu0 %v112
    %129 = vmatprep.subr.bf16.mxu0 0
    %130 = vmatpush1.bf16.msra.mxu0 %v111
    %131 = vmatprep.subr.bf16.mxu0 0
    %132 = vmatpush1.bf16.msra.mxu0 %v110
    %133 = vmatprep.subr.bf16.mxu0 0
    %134 = vmatpush1.bf16.msra.mxu0 %v109
    %135 = vmatprep.subr.bf16.mxu0 0
    %136 = vmatpush1.bf16.msra.mxu0 %v108
    %137 = vmatprep.subr.bf16.mxu0 0
    %138 = vmatpush1.bf16.msra.mxu0 %v107
    %139 = vmatprep.subr.bf16.mxu0 0
    %140 = vmatpush2.bf16.msra.mxu0 0
    %141 = vmatprep.subr.bf16.mxu0 0
    %142 = vmatpush2.bf16.msra.mxu0 0
    %143 = vmatprep.subr.bf16.mxu0 0
    %144 = vmatpush2.bf16.msra.mxu0 0
    %145 = vmatprep.subr.bf16.mxu0 0
    %146 = vmatpush2.bf16.msra.mxu0 0
    %147 = vmatprep.subr.bf16.mxu0 0
    %148 = vmatpush2.bf16.msra.mxu0 0
    %149 = vmatprep.subr.bf16.mxu0 0
    %150 = vmatpush2.bf16.msra.mxu0 0
    %151 = vmatprep.subr.bf16.mxu0 0
    %152 = vmatpush2.bf16.msra.mxu0 0
    %153 = vmatprep.subr.bf16.mxu0 0
    %154 = vmatpush2.bf16.msra.mxu0 0
    %155 = vmatprep.mubr.bf16.mxu0 0
    %156 = vmatmul.mubr.bf16.gmra.mxu0 %v73
    %v157 = vpop.f32.mrf.mxu0
    %v158 = vadd.f32 %v67, %v157
    %v159 = vpop.f32.mrf.mxu0
    %v160 = vpop.f32.mrf.mxu0
    %v161 = vadd.f32 %v67, %v160
    %v162 = vpop.f32.mrf.mxu0
    %163 = vdwg.mxu0
    %v164 = vmax.f32 %v158, 0.0
    %v165 = vmax.f32 %v161, 0.0
    %v166 = vpack.c.bf16 %v165, %v164
    %s167 = scalar_lea.vmem [#allocation5], 64
    %v168 = vld [vmem:[%s167] sm:$0xf]
    %v169 = vld [vmem:[%s167 + $0x4] sm:$0xf]
    %v170 = vld [vmem:[%s167 + $0x8] sm:$0xf]
    %v171 = vld [vmem:[%s167 + $0xc] sm:$0xf]
    %v172 = vld [vmem:[%s167 + $0x10] sm:$0xf]
    %v173 = vld [vmem:[%s167 + $0x14] sm:$0xf]
    %v174 = vld [vmem:[%s167 + $0x18] sm:$0xf]
    %v175 = vld [vmem:[%s167 + $0x1c] sm:$0xf]
    %v176 = vld [vmem:[%s167 + $0x20] sm:$0xf]
    %v177 = vld [vmem:[%s167 + $0x24] sm:$0xf]
    %v178 = vld [vmem:[%s167 + $0x28] sm:$0xf]
    %v179 = vld [vmem:[%s167 + $0x2c] sm:$0xf]
    %v180 = vld [vmem:[%s167 + $0x30] sm:$0xf]
    %v181 = vld [vmem:[%s167 + $0x34] sm:$0xf]
    %v182 = vld [vmem:[%s167 + $0x38] sm:$0xf]
    %v183 = vld [vmem:[%s167 + $0x3c] sm:$0xf]
    %s184 = scalar_lea.vmem %s2, 1
    %v185 = vld [vmem:[%s184] sm:$0x1]
    %v187 = vlaneseq
    %v188 = vshrl.u32 %v187, 7
    %v189 = vsub.s32 0, %v188
    %v190 = vrot.slane %v185, %v189
    %v208 = vunpack.c.l.b16 %v168
    %v209 = vunpack.c.l.b16 %v169
    %v210 = vunpack.c.l.b16 %v170
    %v211 = vunpack.c.l.b16 %v171
    %v212 = vunpack.c.l.b16 %v172
    %v213 = vunpack.c.l.b16 %v173
    %v214 = vunpack.c.l.b16 %v174
    %v215 = vunpack.c.l.b16 %v175
    %v216 = vunpack.c.l.b16 %v176
    %v217 = vunpack.c.l.b16 %v177
    %v218 = vunpack.c.l.b16 %v178
    %v219 = vunpack.c.l.b16 %v179
    %v220 = vunpack.c.l.b16 %v180
    %v221 = vunpack.c.l.b16 %v181
    %v222 = vunpack.c.l.b16 %v182
    %v223 = vunpack.c.l.b16 %v183
    %v224 = vpack.c.b16 %v209, %v208
    %v225 = vpack.c.b16 %v211, %v210
    %v226 = vpack.c.b16 %v213, %v212
    %v227 = vpack.c.b16 %v215, %v214
    %v228 = vpack.c.b16 %v217, %v216
    %v229 = vpack.c.b16 %v219, %v218
    %v230 = vpack.c.b16 %v221, %v220
    %v231 = vpack.c.b16 %v223, %v222
    %240 = vmatprep.subr.bf16.mxu0 0
    %241 = vmatpush1.bf16.msra.mxu0 %v231
    %242 = vmatprep.subr.bf16.mxu0 0
    %243 = vmatpush1.bf16.msra.mxu0 %v230
    %244 = vmatprep.subr.bf16.mxu0 0
    %245 = vmatpush1.bf16.msra.mxu0 %v229
    %246 = vmatprep.subr.bf16.mxu0 0
    %247 = vmatpush1.bf16.msra.mxu0 %v228
    %248 = vmatprep.subr.bf16.mxu0 0
    %249 = vmatpush1.bf16.msra.mxu0 %v227
    %250 = vmatprep.subr.bf16.mxu0 0
    %251 = vmatpush1.bf16.msra.mxu0 %v226
    %252 = vmatprep.subr.bf16.mxu0 0
    %253 = vmatpush1.bf16.msra.mxu0 %v225
    %254 = vmatprep.subr.bf16.mxu0 0
    %255 = vmatpush1.bf16.msra.mxu0 %v224
    %256 = vmatprep.subr.bf16.mxu0 0
    %257 = vmatpush2.bf16.msra.mxu0 0
    %258 = vmatprep.subr.bf16.mxu0 0
    %259 = vmatpush2.bf16.msra.mxu0 0
    %260 = vmatprep.subr.bf16.mxu0 0
    %261 = vmatpush2.bf16.msra.mxu0 0
    %262 = vmatprep.subr.bf16.mxu0 0
    %263 = vmatpush2.bf16.msra.mxu0 0
    %264 = vmatprep.subr.bf16.mxu0 0
    %265 = vmatpush2.bf16.msra.mxu0 0
    %266 = vmatprep.subr.bf16.mxu0 0
    %267 = vmatpush2.bf16.msra.mxu0 0
    %268 = vmatprep.subr.bf16.mxu0 0
    %269 = vmatpush2.bf16.msra.mxu0 0
    %270 = vmatprep.subr.bf16.mxu0 0
    %271 = vmatpush2.bf16.msra.mxu0 0
    %272 = vmatprep.mubr.bf16.mxu0 0
    %273 = vmatmul.mubr.bf16.gmra.mxu0 %v166
    %v274 = vpop.f32.mrf.mxu0
    %v275 = vadd.f32 %v190, %v274
    %v276 = vpop.f32.mrf.mxu0
    %v277 = vpop.f32.mrf.mxu0
    %v278 = vadd.f32 %v190, %v277
    %v279 = vpop.f32.mrf.mxu0
    %280 = vdwg.mxu0
    %v281 = vmax.f32 %v275, 0.0
    %v282 = vmax.f32 %v278, 0.0
    %v283 = vpack.c.bf16 %v282, %v281
    %s284 = scalar_lea.vmem [#allocation5], 128
    %v285 = vld [vmem:[%s284] sm:$0xf]
    %v286 = vld [vmem:[%s284 + $0x4] sm:$0xf]
    %v287 = vld [vmem:[%s284 + $0x8] sm:$0xf]
    %v288 = vld [vmem:[%s284 + $0xc] sm:$0xf]
    %v289 = vld [vmem:[%s284 + $0x10] sm:$0xf]
    %v290 = vld [vmem:[%s284 + $0x14] sm:$0xf]
    %v291 = vld [vmem:[%s284 + $0x18] sm:$0xf]
    %v292 = vld [vmem:[%s284 + $0x1c] sm:$0xf]
    %v293 = vld [vmem:[%s284 + $0x20] sm:$0xf]
    %v294 = vld [vmem:[%s284 + $0x24] sm:$0xf]
    %v295 = vld [vmem:[%s284 + $0x28] sm:$0xf]
    %v296 = vld [vmem:[%s284 + $0x2c] sm:$0xf]
    %v297 = vld [vmem:[%s284 + $0x30] sm:$0xf]
    %v298 = vld [vmem:[%s284 + $0x34] sm:$0xf]
    %v299 = vld [vmem:[%s284 + $0x38] sm:$0xf]
    %v300 = vld [vmem:[%s284 + $0x3c] sm:$0xf]
    %s301 = scalar_lea.vmem %s2, 2
    %v302 = vld [vmem:[%s301] sm:$0x1]
    %v304 = vlaneseq
    %v305 = vshrl.u32 %v304, 7
    %v306 = vsub.s32 0, %v305
    %v307 = vrot.slane %v302, %v306
    %v325 = vunpack.c.l.b16 %v285
    %v326 = vunpack.c.l.b16 %v286
    %v327 = vunpack.c.l.b16 %v287
    %v328 = vunpack.c.l.b16 %v288
    %v329 = vunpack.c.l.b16 %v289
    %v330 = vunpack.c.l.b16 %v290
    %v331 = vunpack.c.l.b16 %v291
    %v332 = vunpack.c.l.b16 %v292
    %v333 = vunpack.c.l.b16 %v293
    %v334 = vunpack.c.l.b16 %v294
    %v335 = vunpack.c.l.b16 %v295
    %v336 = vunpack.c.l.b16 %v296
    %v337 = vunpack.c.l.b16 %v297
    %v338 = vunpack.c.l.b16 %v298
    %v339 = vunpack.c.l.b16 %v299
    %v340 = vunpack.c.l.b16 %v300
    %v341 = vpack.c.b16 %v326, %v325
    %v342 = vpack.c.b16 %v328, %v327
    %v343 = vpack.c.b16 %v330, %v329
    %v344 = vpack.c.b16 %v332, %v331
    %v345 = vpack.c.b16 %v334, %v333
    %v346 = vpack.c.b16 %v336, %v335
    %v347 = vpack.c.b16 %v338, %v337
    %v348 = vpack.c.b16 %v340, %v339
    %357 = vmatprep.subr.bf16.mxu0 0
    %358 = vmatpush1.bf16.msra.mxu0 %v348
    %359 = vmatprep.subr.bf16.mxu0 0
    %360 = vmatpush1.bf16.msra.mxu0 %v347
    %361 = vmatprep.subr.bf16.mxu0 0
    %362 = vmatpush1.bf16.msra.mxu0 %v346
    %363 = vmatprep.subr.bf16.mxu0 0
    %364 = vmatpush1.bf16.msra.mxu0 %v345
    %365 = vmatprep.subr.bf16.mxu0 0
    %366 = vmatpush1.bf16.msra.mxu0 %v344
    %367 = vmatprep.subr.bf16.mxu0 0
    %368 = vmatpush1.bf16.msra.mxu0 %v343
    %369 = vmatprep.subr.bf16.mxu0 0
    %370 = vmatpush1.bf16.msra.mxu0 %v342
    %371 = vmatprep.subr.bf16.mxu0 0
    %372 = vmatpush1.bf16.msra.mxu0 %v341
    %373 = vmatprep.subr.bf16.mxu0 0
    %374 = vmatpush2.bf16.msra.mxu0 0
    %375 = vmatprep.subr.bf16.mxu0 0
    %376 = vmatpush2.bf16.msra.mxu0 0
    %377 = vmatprep.subr.bf16.mxu0 0
    %378 = vmatpush2.bf16.msra.mxu0 0
    %379 = vmatprep.subr.bf16.mxu0 0
    %380 = vmatpush2.bf16.msra.mxu0 0
    %381 = vmatprep.subr.bf16.mxu0 0
    %382 = vmatpush2.bf16.msra.mxu0 0
    %383 = vmatprep.subr.bf16.mxu0 0
    %384 = vmatpush2.bf16.msra.mxu0 0
    %385 = vmatprep.subr.bf16.mxu0 0
    %386 = vmatpush2.bf16.msra.mxu0 0
    %387 = vmatprep.subr.bf16.mxu0 0
    %388 = vmatpush2.bf16.msra.mxu0 0
    %389 = vmatprep.mubr.bf16.mxu0 0
    %390 = vmatmul.mubr.bf16.gmra.mxu0 %v283
    %v391 = vpop.f32.mrf.mxu0
    %v392 = vadd.f32 %v307, %v391
    %v393 = vpop.f32.mrf.mxu0
    %v394 = vpop.f32.mrf.mxu0
    %v395 = vadd.f32 %v307, %v394
    %v396 = vpop.f32.mrf.mxu0
    %397 = vdwg.mxu0
    %v398 = vpack.c.bf16 %v395, %v392
    %v400 = vunpack.c.l.b16 %v398
    %v401 = vunpack.c.h.b16 %v398
    %v402 = vpack.c.b16 %v400, %v400
    %v403 = vpack.c.b16 %v401, %v401
    %406 = vst [vmem:[#allocation7] sm:$0xf] %v402
    %407 = vst [vmem:[#allocation7 + $0x4] sm:$0xf] %v403
    // Predicated region
    $region22: #{tpu_custom_call.1} parent=1 // pred_check
      _
    $region23: #{tpu_custom_call.1} parent=1 // pred_check_branch
      %409 = sbr.rel (0) target = $region25
    $region24: #{tpu_custom_call.1} parent=1 // pred_region
      %s411 = ssub.s32 128, 128
      %412 = vsyncadd [#allocation4], %s411
      %s413 = sshll.u32 [#allocation7], 4
      %s414 = int_to_ptr.vmem [resolvable:$true] %s413
      %419 = dma.vmem_to_hbm [thread:$0]  %s414, 128, %s3, [#allocation4], 64, 64, 4
    $region25: #{tpu_custom_call.1} parent=1 // pred_fallthru
      _
    // Predicated region
    $region26: #{tpu_custom_call.1} parent=1 // pred_check
      _
    $region27: #{tpu_custom_call.1} parent=1 // pred_check_branch
      %421 = sbr.rel (0) target = $region29
    $region28: #{tpu_custom_call.1} parent=1 // pred_region
      %422 = dma.done [#allocation4], 128
    $region29: #{tpu_custom_call.1} parent=1 // pred_fallthru
      _
    %423 = vsyncpa [#allocation3], 1
    %424 = vsyncpa [#allocation6], 1
    %425 = vsyncpa [#allocation4], 1

</llo_original>
